<compile_context>
chip_gen: v6e
topology: v6e:2x2x1
jax: 0.10.0
libtpu: 0.0.40
codegen_flags: <defaults>
</compile_context>

<pallas_src>
import functools

import jax
import jax.numpy as jnp
from jax.experimental import pallas as pl
from jax.experimental.pallas import tpu as pltpu


def _round_up(x, m):
    return (x + m - 1) // m * m


# ---------------------------------------------------------------------------
# m == 2 fast path: squared-L2 distances on the MXU.
# ---------------------------------------------------------------------------
def _membership_mxu_kernel(f_ref, ct_ref, cn_ref, mu_ref, *, eps):
    f = f_ref[...]                                     # (tm, D), input dtype (bf16 ok on MXU)
    f32 = f.astype(jnp.float32)
    f_norm = jnp.sum(f32 * f32, axis=1, keepdims=True)             # (tm, 1)

    # ct_ref holds -2 * C^T (D, K)  ->  cross = -2 * f @ C^T       (MXU, f32 acc)
    cross = jnp.dot(f, ct_ref[...], preferred_element_type=jnp.float32)  # (tm, K)

    # Clamp: guards against cancellation-driven negatives / exact zeros.
    dist = jnp.maximum(f_norm + cross + cn_ref[...], eps)          # (tm, K)

    # 1/dist: EUP approximate reciprocal + one Newton step (VPU) -> ~f32 accurate.
    r = pl.reciprocal(dist, approx=True)
    r = r * (2.0 - dist * r)

    mu = r / jnp.sum(r, axis=1, keepdims=True)         # exact row normalization
    mu_ref[...] = mu.astype(mu_ref.dtype)


# ---------------------------------------------------------------------------
# Generic-m path (power != 2): unroll over the (small, static) cluster count.
# Integer exponents use repeated multiplies instead of EUP float pow.
# ---------------------------------------------------------------------------
def _membership_pow_kernel(f_ref, c_ref, mu_ref, *, power, n_clusters, eps):
    f = f_ref[...].astype(jnp.float32)                 # (tm, D)
    c = c_ref[...].astype(jnp.float32)                 # (K, D)

    int_pow = int(power) if float(power).is_integer() and 1.0 <= power <= 4.0 else None

    cols = []
    for k in range(n_clusters):                        # static, unrolled
        a = jnp.abs(f - c[k:k + 1, :])
        if int_pow is not None:
            p = a
            for _ in range(int_pow - 1):
                p = p * a
        else:
            p = a ** power                             # EUP pow only when unavoidable
        cols.append(jnp.sum(p, axis=1, keepdims=True))
    dist = jnp.maximum(jnp.concatenate(cols, axis=1), eps)   # (tm, K)

    r = 1.0 / dist
    mu_ref[...] = (r / jnp.sum(r, axis=1, keepdims=True)).astype(mu_ref.dtype)


def cluster_membership(features, centers, m=2, *, tm=None):
    """Pallas equivalent of Cluster.forward == Cluster._membership."""
    N, D = features.shape
    K, Dc = centers.shape
    assert D == Dc, "feature dim mismatch"

    b_in = jnp.dtype(features.dtype).itemsize
    out_dtype = jnp.float32                            # always emit f32 memberships

    # ---- tile sizing: budget the streamed (double-buffered) bytes per step ----
    if tm is None:
        stream_budget = 12 << 20                       # ~12 MiB of streaming buffers
        bytes_per_row = 2 * D * b_in + 2 * K * 4       # features + output, double-buffered
        tm = max(8, min(2048, stream_budget // max(1, bytes_per_row)))
        # Keep >= 4 grid steps when there is enough work so the "parallel" grid
        # can shard across both v7x TensorCores (harmless on v5e/v6e).
        if N >= 32:
            tm = min(tm, _round_up(pl.cdiv(N, 4), 8))
    if N < 8:
        tm = N                                         # block dim == full array dim
    else:
        tm = max(8, min(_round_up(int(tm), 8), _round_up(N, 8)))

    grid = (pl.cdiv(N, tm),)                           # Pallas masks the partial last block

    # Explicit scoped-VMEM budget (v5e default is 16 MiB; v7x physical is 64 MiB).
    resident_bytes = 2 * (D * K * b_in + K * 4)        # centers^T + ||c||^2 buffers
    footprint = 2 * tm * D * b_in + 2 * tm * K * 4 + resident_bytes
    vmem_limit = int(max(32 << 20, min(footprint + (8 << 20), 128 << 20)))
    compiler_params = pltpu.CompilerParams(
        dimension_semantics=("parallel",),
        vmem_limit_bytes=vmem_limit,
    )

    out_shape = jax.ShapeDtypeStruct((N, K), out_dtype)

    if abs(float(m) - 2.0) < 1e-9:
        # One-time wrapper prep on the tiny resident operands:
        #   fold -2 into the transposed centers; precompute ||c||^2 in f32.
        c32 = centers.astype(jnp.float32)
        ct = (-2.0 * c32).astype(features.dtype).T                 # (D, K), MXU dtype
        cn = jnp.sum(c32 * c32, axis=1)[None, :]                   # (1, K), f32

        kernel = functools.partial(_membership_mxu_kernel, eps=1e-30)
        mu = pl.pallas_call(
            kernel,
            out_shape=out_shape,
            grid_spec=pltpu.PrefetchScalarGridSpec(
                num_scalar_prefetch=0,
                grid=grid,
                in_specs=[
                    pl.BlockSpec((tm, D), lambda i: (i, 0)),       # streamed feature tile
                    pl.BlockSpec((D, K), lambda i: (0, 0)),        # resident -2*C^T
                    pl.BlockSpec((1, K), lambda i: (0, 0)),        # resident ||c||^2
                ],
                out_specs=pl.BlockSpec((tm, K), lambda i: (i, 0)),  # unpadded K-wide output
            ),
            compiler_params=compiler_params,
        )(features, ct, cn)
    else:
        power = 2.0 / (float(m) - 1.0)
        kernel = functools.partial(_membership_pow_kernel, power=power,
                                   n_clusters=K, eps=1e-30)
        mu = pl.pallas_call(
            kernel,
            out_shape=out_shape,
            grid_spec=pltpu.PrefetchScalarGridSpec(
                num_scalar_prefetch=0,
                grid=grid,
                in_specs=[
                    pl.BlockSpec((tm, D), lambda i: (i, 0)),
                    pl.BlockSpec((K, D), lambda i: (0, 0)),
                ],
                out_specs=pl.BlockSpec((tm, K), lambda i: (i, 0)),
            ),
            compiler_params=compiler_params,
        )(features, centers)

    return mu


def _membership_ref(features, centers, m=2):
    # Pure-JAX reference mirroring the PyTorch code exactly.
    diff = jnp.abs(features[:, None, :] - centers[None, :, :])
    mu = 1.0 / jnp.sum(diff ** (2.0 / (m - 1.0)), axis=2)
    mu = mu / jnp.sum(mu, axis=1, keepdims=True)
    return mu


if __name__ == "__main__":
    key = jax.random.PRNGKey(0)
    k1, k2, k3, k4 = jax.random.split(key, 4)

    # Case 1: small batch, m == 2 MXU fast path (single grid step).
    N, D, K = 8, 32, 4
    features = jax.random.normal(k1, (N, D), dtype=jnp.float32)
    centers = jax.random.normal(k2, (K, D), dtype=jnp.float32)   # nn.Parameter(centers)
    mu = jax.block_until_ready(cluster_membership(features, centers, m=2))
    mu_ref = _membership_ref(features, centers, m=2)
    assert mu.shape == (N, K)
    assert jnp.allclose(mu, mu_ref, atol=1e-5, rtol=1e-5), "mismatch vs reference"
    assert jnp.allclose(jnp.sum(mu, axis=1), 1.0, atol=1e-5), "rows not normalized"

    # Case 2: multi-step grid with a masked partial last row block (70 % 16 != 0)
    # and K not a multiple of 128 (exercises cdiv grid + unpadded K-wide output).
    N2, D2, K2 = 70, 32, 5
    f2 = jax.random.normal(k3, (N2, D2), dtype=jnp.float32)
    c2 = jax.random.normal(k4, (K2, D2), dtype=jnp.float32)
    mu2 = jax.block_until_ready(cluster_membership(f2, c2, m=2, tm=16))
    mu2_ref = _membership_ref(f2, c2, m=2)
    assert mu2.shape == (N2, K2)
    assert jnp.allclose(mu2, mu2_ref, atol=1e-5, rtol=1e-5), "tiled mismatch vs reference"

    # Case 3: generic-m path (m=3 -> power 1.0, integer-power special case).
    mu3 = jax.block_until_ready(cluster_membership(f2, c2, m=3))
    mu3_ref = _membership_ref(f2, c2, m=3)
    assert mu3.shape == (N2, K2)
    assert jnp.allclose(mu3, mu3_ref, atol=1e-5, rtol=1e-5), "generic-m mismatch vs reference"

    print("KERNEL_OK")
</pallas_src>

<mosaic_0001>
module attributes {stable_mosaic.version = 11 : i64} {
  func.func @_membership_mxu_kernel(%arg0: i32, %arg1: memref<8x32xf32, #tpu.memory_space<vmem>>, %arg2: memref<32x4xf32, #tpu.memory_space<vmem>>, %arg3: memref<1x4xf32, #tpu.memory_space<vmem>>, %arg4: memref<8x4xf32, #tpu.memory_space<vmem>>) attributes {dimension_semantics = [#tpu.dimension_semantics<parallel>], iteration_bounds = array<i64: 1>, scalar_prefetch = 0 : i64, scratch_operands = 0 : i64, tpu.core_type = #tpu.core_type<tc>, window_params = [{transform_indices = @transform_0, window_bounds = array<i64: 8, 32>}, {pipeline_mode = #tpu.pipeline_mode<synchronous>, transform_indices = @transform_1, window_bounds = array<i64: 32, 4>}, {pipeline_mode = #tpu.pipeline_mode<synchronous>, transform_indices = @transform_2, window_bounds = array<i64: 1, 4>}, {transform_indices = @transform_3, window_bounds = array<i64: 8, 4>}]} {
    %c0 = arith.constant 0 : index
    %c0_0 = arith.constant 0 : index
    %0 = vector.load %arg1[%c0, %c0_0] : memref<8x32xf32, #tpu.memory_space<vmem>>, vector<8x32xf32>
    %1 = arith.mulf %0, %0 : vector<8x32xf32>
    %cst = arith.constant dense<0.000000e+00> : vector<8xf32>
    %2 = vector.multi_reduction <add>, %1, %cst [1] : vector<8x32xf32> to vector<8xf32>
    %3 = vector.shape_cast %2 : vector<8xf32> to vector<8x1xf32>
    %c0_1 = arith.constant 0 : index
    %c0_2 = arith.constant 0 : index
    %4 = vector.load %arg2[%c0_1, %c0_2] : memref<32x4xf32, #tpu.memory_space<vmem>>, vector<32x4xf32>
    %cst_3 = arith.constant dense<0.000000e+00> : vector<8x4xf32>
    %5 = tpu.matmul %0, %4, %cst_3 {dimension_numbers = #tpu.dot_dimension_numbers<[1], [0], [0], [1], [0, 0, 1, 1], [], []>} : vector<8x32xf32>, vector<32x4xf32>, vector<8x4xf32> -> vector<8x4xf32>
    %6 = vector.broadcast %3 : vector<8x1xf32> to vector<8x4xf32>
    %7 = arith.addf %6, %5 : vector<8x4xf32>
    %c0_4 = arith.constant 0 : index
    %c0_5 = arith.constant 0 : index
    %8 = vector.load %arg3[%c0_4, %c0_5] : memref<1x4xf32, #tpu.memory_space<vmem>>, vector<1x4xf32>
    %9 = vector.broadcast %8 : vector<1x4xf32> to vector<8x4xf32>
    %10 = arith.addf %7, %9 : vector<8x4xf32>
    %cst_6 = arith.constant 1.000000e-30 : f32
    %11 = vector.broadcast %cst_6 : f32 to vector<8x4xf32>
    %12 = arith.maximumf %10, %11 : vector<8x4xf32>
    %13 = tpu.reciprocal %12 {approx = true} : vector<8x4xf32> -> vector<8x4xf32>
    %14 = arith.mulf %12, %13 : vector<8x4xf32>
    %cst_7 = arith.constant 2.000000e+00 : f32
    %15 = vector.broadcast %cst_7 : f32 to vector<8x4xf32>
    %16 = arith.subf %15, %14 : vector<8x4xf32>
    %17 = arith.mulf %13, %16 : vector<8x4xf32>
    %cst_8 = arith.constant dense<0.000000e+00> : vector<8xf32>
    %18 = vector.multi_reduction <add>, %17, %cst_8 [1] : vector<8x4xf32> to vector<8xf32>
    %19 = vector.shape_cast %18 : vector<8xf32> to vector<8x1xf32>
    %20 = vector.broadcast %19 : vector<8x1xf32> to vector<8x4xf32>
    %21 = arith.divf %17, %20 : vector<8x4xf32>
    %c0_9 = arith.constant 0 : index
    %c0_10 = arith.constant 0 : index
    %22 = vector.load %arg4[%c0_9, %c0_10] : memref<8x4xf32, #tpu.memory_space<vmem>>, vector<8x4xf32>
    tpu.vector_store %arg4[%c0_9, %c0_10], %21 {strides = array<i32>} : memref<8x4xf32, #tpu.memory_space<vmem>>, vector<8x4xf32>,
    return
  }
  func.func @transform_0(%arg0: i32) -> (i32, i32) {
    %c0_i32 = arith.constant 0 : i32
    %c0_i32_0 = arith.constant 0 : i32
    return %arg0, %c0_i32 : i32, i32
  }
  func.func @transform_1(%arg0: i32) -> (i32, i32) {
    %c0_i32 = arith.constant 0 : i32
    %c0_i32_0 = arith.constant 0 : i32
    %c0_i32_1 = arith.constant 0 : i32
    return %c0_i32, %c0_i32_0 : i32, i32
  }
  func.func @transform_2(%arg0: i32) -> (i32, i32) {
    %c0_i32 = arith.constant 0 : i32
    %c0_i32_0 = arith.constant 0 : i32
    %c0_i32_1 = arith.constant 0 : i32
    return %c0_i32, %c0_i32_0 : i32, i32
  }
  func.func @transform_3(%arg0: i32) -> (i32, i32) {
    %c0_i32 = arith.constant 0 : i32
    %c0_i32_0 = arith.constant 0 : i32
    return %arg0, %c0_i32 : i32, i32
  }
}

</mosaic_0001>

<llo_original>
// kernel: tpu_custom_call.1
$region0: #{tpu_custom_call.1}
  #allocation0 [shape = 'u32[]', space=smem, size = 0x4, offset = 0x4, fixed_abs, tag = 'smem constant byte address 0x4 - core index']
  #allocation1 [shape = 'u32[144,128]{1,0:T(1,128)}', space=vmem, size = 0x12000, scoped, tag = 'internal scratch']
  %s0 = inlined_call_operand.vmem [shape: f32[8,32], index: 0, kind: input, shape index: {}]
  %s1 = inlined_call_operand.vmem [shape: f32[32,4], index: 1, kind: input, shape index: {}]
  %s2 = inlined_call_operand.vmem [shape: f32[1,4], index: 2, kind: input, shape index: {}]
  %s3 = inlined_call_operand.vmem [shape: f32[8,4], index: 3, kind: output, shape index: {}]
  %s4 = sld [smem:[#allocation0]]
  $region22: #{tpu_custom_call.1} parent=0
    _
  %s6 = ssub.s32 1, %s4
  %s7 = scalar_select 0, %s6, %s4
  // Predicated region
  $region2: #{tpu_custom_call.1} parent=0 // pred_check
    _
  $region3: #{tpu_custom_call.1} parent=0 // pred_check_branch
    %9 = sbr.rel (0) target = $region5
  $region4: #{tpu_custom_call.1} parent=0 // pred_region
    _
  $region5: #{tpu_custom_call.1} parent=0 // pred_fallthru
    _
  // Predicated region
  $region6: #{tpu_custom_call.1} parent=0 // pred_check
    _
  $region7: #{tpu_custom_call.1} parent=0 // pred_check_branch
    %11 = sbr.rel (0) target = $region9
  $region8: #{tpu_custom_call.1} parent=0 // pred_region
    _
  $region9: #{tpu_custom_call.1} parent=0 // pred_fallthru
    _
  // Predicated region
  $region10: #{tpu_custom_call.1} parent=0 // pred_check
    _
  $region11: #{tpu_custom_call.1} parent=0 // pred_check_branch
    %13 = sbr.rel (0) target = $region13
  $region12: #{tpu_custom_call.1} parent=0 // pred_region
    _
  $region13: #{tpu_custom_call.1} parent=0 // pred_fallthru
    _
  %v14 = vld [vmem:[%s0] sm:$0xff]
  %v15 = vmul.f32 %v14, %v14
  %vm16 = vcmask 261120
  %v17 = vsel %vm16, %v15, 0.0
  %18 = vadd.xlane.f32.xlu0 %v17
  %v19 = vpop.xlane.xlu0 %18
  %v20 = vld [vmem:[%s1] sm:$0xff]
  %v21 = vld [vmem:[%s1 + $0x8] sm:$0xff]
  %v22 = vld [vmem:[%s1 + $0x10] sm:$0xff]
  %v23 = vld [vmem:[%s1 + $0x18] sm:$0xff]
  %v25 = vsel %vm16, %v14, 0
  %27 = vmatprep.subr.mxu0 0.0
  %28 = vmatpush1.msra.mxu0 0.0
  %29 = vmatprep.subr.mxu0 0.0
  %30 = vmatpush1.msra.mxu0 0.0
  %31 = vmatprep.subr.mxu0 0.0
  %32 = vmatpush1.msra.mxu0 0.0
  %33 = vmatprep.subr.mxu0 0.0
  %34 = vmatpush1.msra.mxu0 0.0
  %35 = vmatprep.subr.mxu0 0.0
  %36 = vmatpush1.msra.mxu0 0.0
  %37 = vmatprep.subr.mxu0 0.0
  %38 = vmatpush1.msra.mxu0 0.0
  %39 = vmatprep.subr.mxu0 0.0
  %40 = vmatpush1.msra.mxu0 0.0
  %41 = vmatprep.subr.mxu0 0.0
  %42 = vmatpush1.msra.mxu0 0.0
  %43 = vmatprep.subr.mxu0 0.0
  %44 = vmatpush1.msra.mxu0 0.0
  %45 = vmatprep.subr.mxu0 0.0
  %46 = vmatpush1.msra.mxu0 0.0
  %47 = vmatprep.subr.mxu0 0.0
  %48 = vmatpush1.msra.mxu0 0.0
  %49 = vmatprep.subr.mxu0 0.0
  %50 = vmatpush1.msra.mxu0 0.0
  %51 = vmatprep.subr.mxu0 0.0
  %52 = vmatpush1.msra.mxu0 %v23
  %53 = vmatprep.subr.mxu0 0.0
  %54 = vmatpush1.msra.mxu0 %v22
  %55 = vmatprep.subr.mxu0 0.0
  %56 = vmatpush1.msra.mxu0 %v21
  %57 = vmatprep.subr.mxu0 0.0
  %58 = vmatpush1.msra.mxu0 %v20
  %59 = vmatprep.subr.mxu0 0.0
  %60 = vmatpush2.msra.mxu0 0.0
  %61 = vmatprep.subr.mxu0 0.0
  %62 = vmatpush2.msra.mxu0 0.0
  %63 = vmatprep.subr.mxu0 0.0
  %64 = vmatpush2.msra.mxu0 0.0
  %65 = vmatprep.subr.mxu0 0.0
  %66 = vmatpush2.msra.mxu0 0.0
  %67 = vmatprep.subr.mxu0 0.0
  %68 = vmatpush2.msra.mxu0 0.0
  %69 = vmatprep.subr.mxu0 0.0
  %70 = vmatpush2.msra.mxu0 0.0
  %71 = vmatprep.subr.mxu0 0.0
  %72 = vmatpush2.msra.mxu0 0.0
  %73 = vmatprep.subr.mxu0 0.0
  %74 = vmatpush2.msra.mxu0 0.0
  %75 = vmatprep.subr.mxu0 0.0
  %76 = vmatpush2.msra.mxu0 0.0
  %77 = vmatprep.subr.mxu0 0.0
  %78 = vmatpush2.msra.mxu0 0.0
  %79 = vmatprep.subr.mxu0 0.0
  %80 = vmatpush2.msra.mxu0 0.0
  %81 = vmatprep.subr.mxu0 0.0
  %82 = vmatpush2.msra.mxu0 0.0
  %83 = vmatprep.subr.mxu0 0.0
  %84 = vmatpush2.msra.mxu0 0.0
  %85 = vmatprep.subr.mxu0 0.0
  %86 = vmatpush2.msra.mxu0 0.0
  %87 = vmatprep.subr.mxu0 0.0
  %88 = vmatpush2.msra.mxu0 0.0
  %89 = vmatprep.subr.mxu0 0.0
  %90 = vmatpush2.msra.mxu0 0.0
  %91 = vmatprep.mubr.f32.mxu0 0.0
  %92 = vmatmul.mubr.f32.gmra.mxu0 %v25
  %v93 = vpop.f32.mrf.mxu0
  %v94 = vadd.f32 0.0, %v93
  %v95 = vpop.f32.mrf.mxu0
  %96 = vdwg.mxu0
  %v97 = vadd.f32 %v19, %v94
  %v98 = vld [vmem:[%s2] sm:$0x1]
  %v100 = vlaneseq
  %v101 = vshrl.u32 %v100, 7
  %v102 = vsub.s32 0, %v101
  %v103 = vrot.slane %v98, %v102
  %v105 = vadd.f32 %v97, %v103
  %v106 = vmax.f32 %v105, 1e-30
  %v107 = vrcp.pop %v106
  %v108 = vmul.f32 %v106, %v107
  %v109 = vsub.f32 2.0, %v108
  %v110 = vmul.f32 %v107, %v109
  %vm111 = vcmask 31744
  %v112 = vsel %vm111, %v110, 0.0
  %113 = vadd.xlane.f32.xlu0 %v112
  %v114 = vpop.xlane.xlu0 %113
  %v115 = vrcp.pop %v114
  %v116 = vmul.f32 %v110, %v115
  %117 = vst.msk [vmem:[%s3] sm:$0xff] %vm111, %v116
  // Predicated region
  $region14: #{tpu_custom_call.1} parent=0 // pred_check
    _
  $region15: #{tpu_custom_call.1} parent=0 // pred_check_branch
    %119 = sbr.rel (0) target = $region17
  $region16: #{tpu_custom_call.1} parent=0 // pred_region
    _
  $region17: #{tpu_custom_call.1} parent=0 // pred_fallthru
    _
  // Predicated region
  $region18: #{tpu_custom_call.1} parent=0 // pred_check
    _
  $region19: #{tpu_custom_call.1} parent=0 // pred_check_branch
    %121 = sbr.rel (0) target = $region21
  $region20: #{tpu_custom_call.1} parent=0 // pred_region
    _
  $region21: #{tpu_custom_call.1} parent=0 // pred_fallthru
    _

</llo_original>
